<compile_context>
chip_gen: v6e
topology: v6e:2x2x1
jax: 0.10.0
libtpu: 0.0.40
codegen_flags: <defaults>
</compile_context>

<pallas_src>
import functools

import jax
import jax.numpy as jnp
import numpy as np
from jax import lax
from jax.experimental import pallas as pl
from jax.experimental.pallas import tpu as pltpu

NEG_INF = -1e30  # finite "minus infinity" (avoids inf-inf NaN corner cases)


def _round_up(x, m):
    return (x + m - 1) // m * m


def _amsoftmax_kernel(lbl_ref, x_ref, w_ref, out_ref,
                      m_acc, l_acc, t_acc, inv_xn,
                      *, margin, scale, n_classes, tile_c):
    """One (N-tile, C-tile) step of AMSoftmax cross-entropy.

    lbl_ref: (TN, 1) int32     x_ref: (TN, D) f32     w_ref: (D, TC) f32
    out_ref: (TN, 1) f32 per-row loss (written on the last C step)
    scratch: m_acc/l_acc/t_acc/inv_xn all (TN, 1) f32
    """
    j = pl.program_id(1)

    @pl.when(j == 0)
    def _init():
        x0 = x_ref[...]
        ss = jnp.sum(x0 * x0, axis=-1, keepdims=True)
        # torch: x / norm.clamp(min=1e-12)
        inv_xn[...] = 1.0 / jnp.maximum(jnp.sqrt(ss), 1e-12)
        m_acc[...] = jnp.full_like(m_acc, NEG_INF)
        l_acc[...] = jnp.zeros_like(l_acc)
        t_acc[...] = jnp.zeros_like(t_acc)

    x = x_ref[...]                                    # (TN, D)
    w = w_ref[...]                                    # (D, TC)

    # Per-column weight inverse norm (w / norm.clamp(min=1e-12)).
    wss = jnp.sum(w * w, axis=0, keepdims=True)       # (1, TC)
    inv_wn = 1.0 / jnp.maximum(jnp.sqrt(wss), 1e-12)

    # Cosine similarities: MXU matmul on raw tiles, normalize in the epilogue.
    dots = jnp.dot(x, w, preferred_element_type=jnp.float32)   # (TN, TC)
    cos = dots * inv_xn[...] * inv_wn

    # Margin at the true class + mask of padded (out-of-range) classes.
    col = j * tile_c + lax.broadcasted_iota(jnp.int32, cos.shape, 1)
    lbl = lbl_ref[...]                                # (TN, 1) int32
    is_tgt = col == lbl
    logits = scale * (cos - jnp.where(is_tgt, margin, 0.0))
    logits = jnp.where(col < n_classes, logits, NEG_INF)

    # Online logsumexp over the class axis (flash-softmax style).
    cur_max = jnp.max(logits, axis=-1, keepdims=True)
    new_max = jnp.maximum(m_acc[...], cur_max)
    alpha = jnp.exp(m_acc[...] - new_max)
    l_acc[...] = alpha * l_acc[...] + jnp.sum(jnp.exp(logits - new_max),
                                              axis=-1, keepdims=True)
    m_acc[...] = new_max

    # Accumulate the target-class logit (exactly one match across all C tiles).
    t_acc[...] += jnp.sum(jnp.where(is_tgt, logits, 0.0), axis=-1, keepdims=True)

    @pl.when(j == pl.num_programs(1) - 1)
    def _finalize():
        # per-row CE: logsumexp(logits) - logits[label]
        out_ref[...] = (m_acc[...] + jnp.log(l_acc[...])) - t_acc[...]


def am_softmax_loss(x, lb, W, *, m=0.3, s=15.0, tile_n=128, tile_c=512):
    """Pallas implementation of AMSoftmax.forward (mean cross-entropy loss)."""
    N, D = x.shape
    Dw, C = W.shape
    assert Dw == D and lb.shape == (N,)

    x = x.astype(jnp.float32)
    W = W.astype(jnp.float32)
    lb = lb.astype(jnp.int32)

    # Tile / pad sizes: TN multiple of 8 (sublanes), TC multiple of 128 (lanes).
    n8 = _round_up(N, 8)
    tile_n = min(tile_n, n8)
    n_pad = _round_up(N, tile_n)

    tile_c = min(tile_c, _round_up(C, 128))
    c_pad = _round_up(C, tile_c)

    x_p = jnp.zeros((n_pad, D), jnp.float32).at[:N].set(x)
    w_p = jnp.zeros((D, c_pad), jnp.float32).at[:, :C].set(W)
    lb_p = jnp.zeros((n_pad, 1), jnp.int32).at[:N, 0].set(lb)

    kernel = functools.partial(_amsoftmax_kernel, margin=float(m), scale=float(s),
                               n_classes=C, tile_c=tile_c)

    per_row = pl.pallas_call(
        kernel,
        out_shape=jax.ShapeDtypeStruct((n_pad, 1), jnp.float32),
        grid_spec=pltpu.PrefetchScalarGridSpec(
            num_scalar_prefetch=0,
            grid=(n_pad // tile_n, c_pad // tile_c),
            in_specs=[
                pl.BlockSpec((tile_n, 1), lambda i, j: (i, 0)),   # labels
                pl.BlockSpec((tile_n, D), lambda i, j: (i, 0)),   # x (resident across j)
                pl.BlockSpec((D, tile_c), lambda i, j: (0, j)),   # W columns
            ],
            out_specs=pl.BlockSpec((tile_n, 1), lambda i, j: (i, 0)),
            scratch_shapes=[pltpu.VMEM((tile_n, 1), jnp.float32),   # running max
                            pltpu.VMEM((tile_n, 1), jnp.float32),   # running sum-exp
                            pltpu.VMEM((tile_n, 1), jnp.float32),   # target logit
                            pltpu.VMEM((tile_n, 1), jnp.float32)],  # cached 1/|x|
        ),
        compiler_params=pltpu.CompilerParams(
            dimension_semantics=("parallel", "arbitrary")),
    )(lb_p, x_p, w_p)

    # CrossEntropyLoss default reduction='mean' over the real batch rows.
    return jnp.mean(per_row[:N, 0])


def am_softmax_ref(x, lb, W, *, m=0.3, s=15.0):
    """Pure-JAX reference mirroring the PyTorch AMSoftmax.forward."""
    x = x.astype(jnp.float32)
    W = W.astype(jnp.float32)
    xn = x / jnp.maximum(jnp.sqrt(jnp.sum(x * x, axis=1, keepdims=True)), 1e-12)
    wn = W / jnp.maximum(jnp.sqrt(jnp.sum(W * W, axis=0, keepdims=True)), 1e-12)
    costh = xn @ wn
    logits = s * (costh - m * jax.nn.one_hot(lb, W.shape[1], dtype=jnp.float32))
    logz = jax.scipy.special.logsumexp(logits, axis=1)
    tgt = jnp.take_along_axis(logits, lb[:, None].astype(jnp.int32), axis=1)[:, 0]
    return jnp.mean(logz - tgt)


if __name__ == "__main__":
    key = jax.random.PRNGKey(0)
    k1, k2, k3 = jax.random.split(key, 3)

    batch, in_feats, n_classes = 8, 32, 751   # module default n_classes=751
    x = jax.random.normal(k1, (batch, in_feats), dtype=jnp.float32)
    # xavier_normal_-style init for W
    std = (2.0 / (in_feats + n_classes)) ** 0.5
    W = std * jax.random.normal(k2, (in_feats, n_classes), dtype=jnp.float32)
    lb = jax.random.randint(k3, (batch,), 0, n_classes, dtype=jnp.int32)

    loss = jax.block_until_ready(am_softmax_loss(x, lb, W, m=0.3, s=15.0))
    loss_ref = jax.block_until_ready(am_softmax_ref(x, lb, W, m=0.3, s=15.0))
    np.testing.assert_allclose(np.asarray(loss), np.asarray(loss_ref),
                               rtol=1e-5, atol=1e-4)
    print("KERNEL_OK")
</pallas_src>

<mosaic_0001>
module attributes {stable_mosaic.version = 11 : i64} {
  func.func @_amsoftmax_kernel(%arg0: i32, %arg1: i32, %arg2: memref<8x1xi32, #tpu.memory_space<vmem>>, %arg3: memref<8x32xf32, #tpu.memory_space<vmem>>, %arg4: memref<32x512xf32, #tpu.memory_space<vmem>>, %arg5: memref<8x1xf32, #tpu.memory_space<vmem>>, %arg6: memref<8x1xf32, #tpu.memory_space<vmem>>, %arg7: memref<8x1xf32, #tpu.memory_space<vmem>>, %arg8: memref<8x1xf32, #tpu.memory_space<vmem>>, %arg9: memref<8x1xf32, #tpu.memory_space<vmem>>) attributes {dimension_semantics = [#tpu.dimension_semantics<parallel>, #tpu.dimension_semantics<arbitrary>], iteration_bounds = array<i64: 1, 2>, scalar_prefetch = 0 : i64, scratch_operands = 4 : i64, tpu.core_type = #tpu.core_type<tc>, window_params = [{transform_indices = @transform_0, window_bounds = array<i64: 8, 1>}, {transform_indices = @transform_1, window_bounds = array<i64: 8, 32>}, {transform_indices = @transform_2, window_bounds = array<i64: 32, 512>}, {transform_indices = @transform_3, window_bounds = array<i64: 8, 1>}]} {
    %c0_i32 = arith.constant 0 : i32
    %0 = arith.cmpi eq, %arg1, %c0_i32 : i32
    %1 = arith.extui %0 : i1 to i32
    %c0_i32_0 = arith.constant 0 : i32
    %2 = arith.cmpi ne, %1, %c0_i32_0 : i32
    scf.if %2 {
      %c0_34 = arith.constant 0 : index
      %c0_35 = arith.constant 0 : index
      %63 = vector.load %arg3[%c0_34, %c0_35] : memref<8x32xf32, #tpu.memory_space<vmem>>, vector<8x32xf32>
      %64 = arith.mulf %63, %63 : vector<8x32xf32>
      %cst_36 = arith.constant dense<0.000000e+00> : vector<8xf32>
      %65 = vector.multi_reduction <add>, %64, %cst_36 [1] : vector<8x32xf32> to vector<8xf32>
      %66 = vector.shape_cast %65 : vector<8xf32> to vector<8x1xf32>
      %67 = math.sqrt %66 : vector<8x1xf32>
      %cst_37 = arith.constant 9.99999996E-13 : f32
      %68 = vector.broadcast %cst_37 : f32 to vector<8x1xf32>
      %69 = arith.maximumf %67, %68 : vector<8x1xf32>
      %cst_38 = arith.constant 1.000000e+00 : f32
      %70 = vector.broadcast %cst_38 : f32 to vector<8x1xf32>
      %71 = arith.divf %70, %69 : vector<8x1xf32>
      %c0_39 = arith.constant 0 : index
      %c0_40 = arith.constant 0 : index
      %72 = vector.load %arg9[%c0_39, %c0_40] : memref<8x1xf32, #tpu.memory_space<vmem>>, vector<8x1xf32>
      tpu.vector_store %arg9[%c0_39, %c0_40], %71 {strides = array<i32>} : memref<8x1xf32, #tpu.memory_space<vmem>>, vector<8x1xf32>,
      %cst_41 = arith.constant -1.000000e+30 : f32
      %73 = vector.broadcast %cst_41 : f32 to vector<8x1xf32>
      %c0_42 = arith.constant 0 : index
      %c0_43 = arith.constant 0 : index
      %74 = vector.load %arg6[%c0_42, %c0_43] : memref<8x1xf32, #tpu.memory_space<vmem>>, vector<8x1xf32>
      tpu.vector_store %arg6[%c0_42, %c0_43], %73 {strides = array<i32>} : memref<8x1xf32, #tpu.memory_space<vmem>>, vector<8x1xf32>,
      %cst_44 = arith.constant 0.000000e+00 : f32
      %75 = vector.broadcast %cst_44 : f32 to vector<8x1xf32>
      %c0_45 = arith.constant 0 : index
      %c0_46 = arith.constant 0 : index
      %76 = vector.load %arg7[%c0_45, %c0_46] : memref<8x1xf32, #tpu.memory_space<vmem>>, vector<8x1xf32>
      tpu.vector_store %arg7[%c0_45, %c0_46], %75 {strides = array<i32>} : memref<8x1xf32, #tpu.memory_space<vmem>>, vector<8x1xf32>,
      %cst_47 = arith.constant 0.000000e+00 : f32
      %77 = vector.broadcast %cst_47 : f32 to vector<8x1xf32>
      %c0_48 = arith.constant 0 : index
      %c0_49 = arith.constant 0 : index
      %78 = vector.load %arg8[%c0_48, %c0_49] : memref<8x1xf32, #tpu.memory_space<vmem>>, vector<8x1xf32>
      tpu.vector_store %arg8[%c0_48, %c0_49], %77 {strides = array<i32>} : memref<8x1xf32, #tpu.memory_space<vmem>>, vector<8x1xf32>,
    } else {
    }
    %c0 = arith.constant 0 : index
    %c0_1 = arith.constant 0 : index
    %3 = vector.load %arg3[%c0, %c0_1] : memref<8x32xf32, #tpu.memory_space<vmem>>, vector<8x32xf32>
    %c0_2 = arith.constant 0 : index
    %c0_3 = arith.constant 0 : index
    %4 = vector.load %arg4[%c0_2, %c0_3] : memref<32x512xf32, #tpu.memory_space<vmem>>, vector<32x512xf32>
    %5 = arith.mulf %4, %4 : vector<32x512xf32>
    %cst = arith.constant dense<0.000000e+00> : vector<512xf32>
    %6 = vector.multi_reduction <add>, %5, %cst [0] : vector<32x512xf32> to vector<512xf32>
    %7 = vector.shape_cast %6 : vector<512xf32> to vector<1x512xf32>
    %8 = math.sqrt %7 : vector<1x512xf32>
    %cst_4 = arith.constant 9.99999996E-13 : f32
    %9 = vector.broadcast %cst_4 : f32 to vector<1x512xf32>
    %10 = arith.maximumf %8, %9 : vector<1x512xf32>
    %cst_5 = arith.constant 1.000000e+00 : f32
    %11 = vector.broadcast %cst_5 : f32 to vector<1x512xf32>
    %12 = arith.divf %11, %10 : vector<1x512xf32>
    %cst_6 = arith.constant dense<0.000000e+00> : vector<8x512xf32>
    %13 = tpu.matmul %3, %4, %cst_6 {dimension_numbers = #tpu.dot_dimension_numbers<[1], [0], [0], [1], [0, 0, 1, 1], [], []>} : vector<8x32xf32>, vector<32x512xf32>, vector<8x512xf32> -> vector<8x512xf32>
    %c0_7 = arith.constant 0 : index
    %c0_8 = arith.constant 0 : index
    %14 = vector.load %arg9[%c0_7, %c0_8] : memref<8x1xf32, #tpu.memory_space<vmem>>, vector<8x1xf32>
    %15 = vector.broadcast %14 : vector<8x1xf32> to vector<8x512xf32>
    %16 = arith.mulf %13, %15 : vector<8x512xf32>
    %17 = vector.broadcast %12 : vector<1x512xf32> to vector<8x512xf32>
    %18 = arith.mulf %16, %17 : vector<8x512xf32>
    %c512_i32 = arith.constant 512 : i32
    %19 = arith.muli %arg1, %c512_i32 : i32
    %20 = tpu.iota {dimensions = array<i32: 1>} : vector<8x512xi32>
    %21 = vector.broadcast %19 : i32 to vector<8x512xi32>
    %22 = arith.addi %21, %20 : vector<8x512xi32>
    %c0_9 = arith.constant 0 : index
    %c0_10 = arith.constant 0 : index
    %23 = vector.load %arg2[%c0_9, %c0_10] : memref<8x1xi32, #tpu.memory_space<vmem>>, vector<8x1xi32>
    %24 = vector.broadcast %23 : vector<8x1xi32> to vector<8x512xi32>
    %25 = arith.cmpi eq, %22, %24 : vector<8x512xi32>
    %cst_11 = arith.constant 3.000000e-01 : f32
    %cst_12 = arith.constant 0.000000e+00 : f32
    %26 = vector.broadcast %cst_11 : f32 to vector<8x512xf32>
    %27 = vector.broadcast %cst_12 : f32 to vector<8x512xf32>
    %28 = arith.select %25, %26, %27 : vector<8x512xi1>, vector<8x512xf32>
    %29 = arith.subf %18, %28 : vector<8x512xf32>
    %cst_13 = arith.constant 1.500000e+01 : f32
    %30 = vector.broadcast %cst_13 : f32 to vector<8x512xf32>
    %31 = arith.mulf %30, %29 : vector<8x512xf32>
    %c751_i32 = arith.constant 751 : i32
    %32 = vector.broadcast %c751_i32 : i32 to vector<8x512xi32>
    %33 = arith.cmpi slt, %22, %32 : vector<8x512xi32>
    %cst_14 = arith.constant -1.000000e+30 : f32
    %34 = vector.broadcast %cst_14 : f32 to vector<8x512xf32>
    %35 = arith.select %33, %31, %34 : vector<8x512xi1>, vector<8x512xf32>
    %cst_15 = arith.constant dense<0xFF800000> : vector<8xf32>
    %36 = vector.multi_reduction <maximumf>, %35, %cst_15 [1] : vector<8x512xf32> to vector<8xf32>
    %37 = vector.shape_cast %36 : vector<8xf32> to vector<8x1xf32>
    %c0_16 = arith.constant 0 : index
    %c0_17 = arith.constant 0 : index
    %38 = vector.load %arg6[%c0_16, %c0_17] : memref<8x1xf32, #tpu.memory_space<vmem>>, vector<8x1xf32>
    %39 = arith.maximumf %38, %37 : vector<8x1xf32>
    %c0_18 = arith.constant 0 : index
    %c0_19 = arith.constant 0 : index
    %40 = vector.load %arg6[%c0_18, %c0_19] : memref<8x1xf32, #tpu.memory_space<vmem>>, vector<8x1xf32>
    %41 = arith.subf %40, %39 : vector<8x1xf32>
    %42 = math.exp %41 : vector<8x1xf32>
    %c0_20 = arith.constant 0 : index
    %c0_21 = arith.constant 0 : index
    %43 = vector.load %arg7[%c0_20, %c0_21] : memref<8x1xf32, #tpu.memory_space<vmem>>, vector<8x1xf32>
    %44 = arith.mulf %42, %43 : vector<8x1xf32>
    %45 = vector.broadcast %39 : vector<8x1xf32> to vector<8x512xf32>
    %46 = arith.subf %35, %45 : vector<8x512xf32>
    %47 = math.exp %46 : vector<8x512xf32>
    %cst_22 = arith.constant dense<0.000000e+00> : vector<8xf32>
    %48 = vector.multi_reduction <add>, %47, %cst_22 [1] : vector<8x512xf32> to vector<8xf32>
    %49 = vector.shape_cast %48 : vector<8xf32> to vector<8x1xf32>
    %50 = arith.addf %44, %49 : vector<8x1xf32>
    %c0_23 = arith.constant 0 : index
    %c0_24 = arith.constant 0 : index
    %51 = vector.load %arg7[%c0_23, %c0_24] : memref<8x1xf32, #tpu.memory_space<vmem>>, vector<8x1xf32>
    tpu.vector_store %arg7[%c0_23, %c0_24], %50 {strides = array<i32>} : memref<8x1xf32, #tpu.memory_space<vmem>>, vector<8x1xf32>,
    %c0_25 = arith.constant 0 : index
    %c0_26 = arith.constant 0 : index
    %52 = vector.load %arg6[%c0_25, %c0_26] : memref<8x1xf32, #tpu.memory_space<vmem>>, vector<8x1xf32>
    tpu.vector_store %arg6[%c0_25, %c0_26], %39 {strides = array<i32>} : memref<8x1xf32, #tpu.memory_space<vmem>>, vector<8x1xf32>,
    %c0_27 = arith.constant 0 : index
    %c0_28 = arith.constant 0 : index
    %53 = vector.load %arg8[%c0_27, %c0_28] : memref<8x1xf32, #tpu.memory_space<vmem>>, vector<8x1xf32>
    %cst_29 = arith.constant 0.000000e+00 : f32
    %54 = vector.broadcast %cst_29 : f32 to vector<8x512xf32>
    %55 = arith.select %25, %35, %54 : vector<8x512xi1>, vector<8x512xf32>
    %cst_30 = arith.constant dense<0.000000e+00> : vector<8xf32>
    %56 = vector.multi_reduction <add>, %55, %cst_30 [1] : vector<8x512xf32> to vector<8xf32>
    %57 = vector.shape_cast %56 : vector<8xf32> to vector<8x1xf32>
    %58 = arith.addf %53, %57 : vector<8x1xf32>
    %c0_31 = arith.constant 0 : index
    %c0_32 = arith.constant 0 : index
    %59 = vector.load %arg8[%c0_31, %c0_32] : memref<8x1xf32, #tpu.memory_space<vmem>>, vector<8x1xf32>
    tpu.vector_store %arg8[%c0_31, %c0_32], %58 {strides = array<i32>} : memref<8x1xf32, #tpu.memory_space<vmem>>, vector<8x1xf32>,
    %c1_i32 = arith.constant 1 : i32
    %60 = arith.cmpi eq, %arg1, %c1_i32 : i32
    %61 = arith.extui %60 : i1 to i32
    %c0_i32_33 = arith.constant 0 : i32
    %62 = arith.cmpi ne, %61, %c0_i32_33 : i32
    scf.if %62 {
      %c0_34 = arith.constant 0 : index
      %c0_35 = arith.constant 0 : index
      %63 = vector.load %arg6[%c0_34, %c0_35] : memref<8x1xf32, #tpu.memory_space<vmem>>, vector<8x1xf32>
      %c0_36 = arith.constant 0 : index
      %c0_37 = arith.constant 0 : index
      %64 = vector.load %arg7[%c0_36, %c0_37] : memref<8x1xf32, #tpu.memory_space<vmem>>, vector<8x1xf32>
      %65 = math.log %64 : vector<8x1xf32>
      %66 = arith.addf %63, %65 : vector<8x1xf32>
      %c0_38 = arith.constant 0 : index
      %c0_39 = arith.constant 0 : index
      %67 = vector.load %arg8[%c0_38, %c0_39] : memref<8x1xf32, #tpu.memory_space<vmem>>, vector<8x1xf32>
      %68 = arith.subf %66, %67 : vector<8x1xf32>
      %c0_40 = arith.constant 0 : index
      %c0_41 = arith.constant 0 : index
      %69 = vector.load %arg5[%c0_40, %c0_41] : memref<8x1xf32, #tpu.memory_space<vmem>>, vector<8x1xf32>
      tpu.vector_store %arg5[%c0_40, %c0_41], %68 {strides = array<i32>} : memref<8x1xf32, #tpu.memory_space<vmem>>, vector<8x1xf32>,
    } else {
    }
    return
  }
  func.func @transform_0(%arg0: i32, %arg1: i32) -> (i32, i32) {
    %c0_i32 = arith.constant 0 : i32
    %c0_i32_0 = arith.constant 0 : i32
    return %arg0, %c0_i32 : i32, i32
  }
  func.func @transform_1(%arg0: i32, %arg1: i32) -> (i32, i32) {
    %c0_i32 = arith.constant 0 : i32
    %c0_i32_0 = arith.constant 0 : i32
    return %arg0, %c0_i32 : i32, i32
  }
  func.func @transform_2(%arg0: i32, %arg1: i32) -> (i32, i32) {
    %c0_i32 = arith.constant 0 : i32
    %c0_i32_0 = arith.constant 0 : i32
    return %c0_i32, %arg1 : i32, i32
  }
  func.func @transform_3(%arg0: i32, %arg1: i32) -> (i32, i32) {
    %c0_i32 = arith.constant 0 : i32
    %c0_i32_0 = arith.constant 0 : i32
    return %arg0, %c0_i32 : i32, i32
  }
}

</mosaic_0001>

<llo_original>
// kernel: tpu_custom_call.1
$region0: #{tpu_custom_call.1}
  #allocation0 [shape = 'u32[]', space=smem, size = 0x4, offset = 0x4, fixed_abs, tag = 'smem constant byte address 0x4 - core index']
  #allocation1 [shape = 'u32[144,128]{1,0:T(1,128)}', space=vmem, size = 0x12000, scoped, tag = 'internal scratch']
  #allocation2 [shape = 'f32[8,1]{1,0:T(8,128)}', space=vmem, size = 0x1000, scoped, tag = 'scratch operand']
  #allocation3 [shape = 'f32[8,1]{1,0:T(8,128)}', space=vmem, size = 0x1000, scoped, tag = 'scratch operand']
  #allocation4 [shape = 'f32[8,1]{1,0:T(8,128)}', space=vmem, size = 0x1000, scoped, tag = 'scratch operand']
  #allocation5 [shape = 'f32[8,1]{1,0:T(8,128)}', space=vmem, size = 0x1000, scoped, tag = 'scratch operand']
  %s0 = inlined_call_operand.vmem [shape: s32[8,1], index: 0, kind: input, shape index: {}]
  %s1 = inlined_call_operand.vmem [shape: f32[8,32], index: 1, kind: input, shape index: {}]
  %s2 = inlined_call_operand.hbm [shape: f32[32,1024], index: 2, kind: input, shape index: {}]
  %s3 = inlined_call_operand.vmem [shape: f32[8,1], index: 3, kind: output, shape index: {}]
  %s4 = sld [smem:[#allocation0]]
  $region57: #{tpu_custom_call.1} parent=0
    _
  %s6 = ssub.s32 1, %s4
  %s7 = scalar_select 0, %s6, %s4
  $region1: #{tpu_custom_call.1} parent=0
    #allocation6 [shape = 'u8[131072]{0}', space=vmem, size = 0x20000, scoped, tag = 'input window, operand 2']
    #allocation7 [shape = 's32[2]{0}', space=sflag, size = 0x8, scoped, tag = 'scoped memory for tpu_custom_call.1']
    %8 = vsyncpa [#allocation7], 0
    %s9 = scalar_lea.sflag [#allocation7], 1
    %10 = vsyncpa %s9, 0
    loop: start=0, step=1, limit=4
    $region2: #{tpu_custom_call.1} parent=1 // loop_pre_header
      _
    $region3: #{tpu_custom_call.1} parent=1 // loop_header
      %s12 = sphi 0, %s16
      %p13 = scmp.ge.s32.totalorder %s12, 4
      %s19 = sphi 0, %s31
      %s20 = sphi 0, %s27
      %s21 = sphi 0, %s19
      %s22 = sphi 0, %s20
      %s23 = sphi 0, %s21
      %s24 = sphi 0, %s22
      %s34 = sphi 0, %s36
      %s37 = sphi 0, %s34
      %s38 = sphi 0, %s37
      %s54 = sphi 0, %s38
      %s60 = sphi 0, %s62
      %s63 = sphi 0, %s60
      %s64 = sphi 0, %s63
      %s80 = sphi 0, %s64
      %s86 = sphi 0, %s88
      %s89 = sphi 0, %s86
      %s90 = sphi 0, %s89
      %s106 = sphi 0, %s90
      %s112 = sphi 0, %s114
      %s115 = sphi 0, %s112
      %s116 = sphi 0, %s115
      %s132 = sphi 0, %s116
    $region4: #{tpu_custom_call.1} parent=1 // loop_header_branch
      %15 = sbr.rel (%p13) target = $region8
    $region5: #{tpu_custom_call.1} parent=1 // loop_body
      %s17 = ssub.s32 %s12, 1
      %s18 = ssub.s32 %s12, 2
      %s25 = sadd.s32 1, %s20
      %p26 = scmp.ge.s32.totalorder %s25, 2
      %s27 = scalar_select %p26, 0, %s25
      %s28 = sadd.s32 1, %s19
      %s29 = scalar_select %p26, %s28, %s19
      %p30 = scmp.ge.s32.totalorder %s29, 1
      %s31 = scalar_select %p30, 0, %s29
      %s32 = ssub.s32 %s19, %s31
      %p33 = scmp.eq.s32.totalorder %s32, 0
      %s35 = sadd.s32 %s34, 1
      %s36 = scalar_select %p33, %s34, %s35
      %p39 = pneg %p33
      %p40 = scmp.eq.s32.totalorder %s12, 1
      %p41 = por %p39, %p40
      %p42 = scmp.ne.s32.totalorder %s34, %s37
      %p43 = scmp.eq.s32.totalorder %s12, 0
      %p44 = por %p42, %p43
      %p45 = scmp.ne.s32.totalorder %s34, %s37
      %p46 = scmp.eq.s32.totalorder %s17, 1
      %p47 = por %p45, %p46
      %p48 = scmp.ne.s32.totalorder %s37, %s38
      %p49 = scmp.eq.s32.totalorder %s17, 0
      %p50 = por %p48, %p49
      %p51 = scmp.ne.s32.totalorder %s37, %s38
      %p52 = scmp.eq.s32.totalorder %s18, 1
      %p53 = por %p51, %p52
      %p55 = scmp.ne.s32.totalorder %s38, %s54
      %p56 = scmp.eq.s32.totalorder %s18, 0
      %p57 = por %p55, %p56
      %s58 = ssub.s32 %s19, %s31
      %p59 = scmp.eq.s32.totalorder %s58, 0
      %s61 = sadd.s32 %s60, 1
      %s62 = scalar_select %p59, %s60, %s61
      %p65 = pneg %p59
      %p66 = scmp.eq.s32.totalorder %s12, 1
      %p67 = por %p65, %p66
      %p68 = scmp.ne.s32.totalorder %s60, %s63
      %p69 = scmp.eq.s32.totalorder %s12, 0
      %p70 = por %p68, %p69
      %p71 = scmp.ne.s32.totalorder %s60, %s63
      %p72 = scmp.eq.s32.totalorder %s17, 1
      %p73 = por %p71, %p72
      %p74 = scmp.ne.s32.totalorder %s63, %s64
      %p75 = scmp.eq.s32.totalorder %s17, 0
      %p76 = por %p74, %p75
      %p77 = scmp.ne.s32.totalorder %s63, %s64
      %p78 = scmp.eq.s32.totalorder %s18, 1
      %p79 = por %p77, %p78
      %p81 = scmp.ne.s32.totalorder %s64, %s80
      %p82 = scmp.eq.s32.totalorder %s18, 0
      %p83 = por %p81, %p82
      %s84 = ssub.s32 %s20, %s27
      %p85 = scmp.eq.s32.totalorder %s84, 0
      %s87 = sadd.s32 %s86, 1
      %s88 = scalar_select %p85, %s86, %s87
      %p91 = pneg %p85
      %p92 = scmp.eq.s32.totalorder %s12, 1
      %p93 = por %p91, %p92
      %p94 = scmp.ne.s32.totalorder %s86, %s89
      %p95 = scmp.eq.s32.totalorder %s12, 0
      %p96 = por %p94, %p95
      %p97 = scmp.ne.s32.totalorder %s86, %s89
      %p98 = scmp.eq.s32.totalorder %s17, 1
      %p99 = por %p97, %p98
      %p100 = scmp.ne.s32.totalorder %s89, %s90
      %p101 = scmp.eq.s32.totalorder %s17, 0
      %p102 = por %p100, %p101
      %p103 = scmp.ne.s32.totalorder %s89, %s90
      %p104 = scmp.eq.s32.totalorder %s18, 1
      %p105 = por %p103, %p104
      %p107 = scmp.ne.s32.totalorder %s90, %s106
      %p108 = scmp.eq.s32.totalorder %s18, 0
      %p109 = por %p107, %p108
      %s110 = ssub.s32 %s19, %s31
      %p111 = scmp.eq.s32.totalorder %s110, 0
      %s113 = sadd.s32 %s112, 1
      %s114 = scalar_select %p111, %s112, %s113
      %p117 = pneg %p111
      %p118 = scmp.eq.s32.totalorder %s12, 1
      %p119 = por %p117, %p118
      %p120 = scmp.ne.s32.totalorder %s112, %s115
      %p121 = scmp.eq.s32.totalorder %s12, 0
      %p122 = por %p120, %p121
      %p123 = scmp.ne.s32.totalorder %s112, %s115
      %p124 = scmp.eq.s32.totalorder %s17, 1
      %p125 = por %p123, %p124
      %p126 = scmp.ne.s32.totalorder %s115, %s116
      %p127 = scmp.eq.s32.totalorder %s17, 0
      %p128 = por %p126, %p127
      %p129 = scmp.ne.s32.totalorder %s115, %s116
      %p130 = scmp.eq.s32.totalorder %s18, 1
      %p131 = por %p129, %p130
      %p133 = scmp.ne.s32.totalorder %s116, %s132
      %p134 = scmp.eq.s32.totalorder %s18, 0
      %p135 = por %p133, %p134
      %p136 = scmp.le.s32.totalorder 1, %s12
      %p137 = scmp.lt.s32.totalorder %s12, 3
      %p138 = pnand %p136, %p137
      %p139 = pneg %p138
      // Predicated region
      $region9: #{tpu_custom_call.1} parent=5 // pred_check
        _
      $region10: #{tpu_custom_call.1} parent=5 // pred_check_branch
        %141 = sbr.rel (%p138) target = $region12
      $region11: #{tpu_custom_call.1} parent=5 // pred_region
        %s142 = ssub.s32 %s12, 1
        // Predicated region
        $region13: #{tpu_custom_call.1} parent=11 // pred_check
          %p143 = pneg %p50
        $region14: #{tpu_custom_call.1} parent=11 // pred_check_branch
          %145 = sbr.rel (%p143) target = $region16
        $region15: #{tpu_custom_call.1} parent=11 // pred_region
          %p146 = scmp.lt.s32.totalorder %s21, 0
          %s147 = scalar_select %p146, %s21, 0
          %s148 = smul.addr %s147, 8
          %s149 = scalar_lea.vmem %s0, %s148
        $region16: #{tpu_custom_call.1} parent=11 // pred_fallthru
          _
        // Predicated region
        $region17: #{tpu_custom_call.1} parent=11 // pred_check
          %p150 = pneg %p76
        $region18: #{tpu_custom_call.1} parent=11 // pred_check_branch
          %152 = sbr.rel (%p150) target = $region20
        $region19: #{tpu_custom_call.1} parent=11 // pred_region
          %p153 = scmp.lt.s32.totalorder %s21, 0
          %s154 = scalar_select %p153, %s21, 0
          %s155 = smul.addr %s154, 8
          %s156 = scalar_lea.vmem %s1, %s155
        $region20: #{tpu_custom_call.1} parent=11 // pred_fallthru
          _
      $region12: #{tpu_custom_call.1} parent=5 // pred_fallthru
        _
      %p157 = scmp.lt.s32.totalorder %s12, 2
      // Predicated region
      $region21: #{tpu_custom_call.1} parent=5 // pred_check
        %p158 = pneg %p157
      $region22: #{tpu_custom_call.1} parent=5 // pred_check_branch
        %160 = sbr.rel (%p158) target = $region24
      $region23: #{tpu_custom_call.1} parent=5 // pred_region
        // Predicated region
        $region25: #{tpu_custom_call.1} parent=23 // pred_check
          %p161 = pneg %p96
        $region26: #{tpu_custom_call.1} parent=23 // pred_check_branch
          %163 = sbr.rel (%p161) target = $region28
        $region27: #{tpu_custom_call.1} parent=23 // pred_region
          %s164 = sand.u32 %s86, 1
          %s165 = scalar_lea.sflag [#allocation7], %s164
          %s166 = sand.u32 %s86, 1
          %s167 = smul.addr %s166, 128
          %s168 = scalar_lea.vmem [#allocation6], %s167
          %s169 = smul.u32 4, %s20
          %s171 = ssub.s32 2048, 2048
          %172 = vsyncadd %s165, %s171
          %s173 = smul.addr %s169, 128
          %s174 = scalar_lea.hbm %s2, %s173
          %s175 = sshll.u32 %s168, 4
          %s176 = int_to_ptr.vmem [resolvable:$true] %s175
          %181 = dma.hbm_to_vmem [thread:$0]  %s174, 2048, %s176, %s165, 1024, 512, 32
        $region28: #{tpu_custom_call.1} parent=23 // pred_fallthru
          _
      $region24: #{tpu_custom_call.1} parent=5 // pred_fallthru
        _
      %p182 = scmp.le.s32.totalorder 1, %s12
      %p183 = scmp.lt.s32.totalorder %s12, 3
      %p184 = pnand %p182, %p183
      %p185 = pneg %p184
      // Predicated region
      $region29: #{tpu_custom_call.1} parent=5 // pred_check
        _
      $region30: #{tpu_custom_call.1} parent=5 // pred_check_branch
        %187 = sbr.rel (%p184) target = $region32
      $region31: #{tpu_custom_call.1} parent=5 // pred_region
        %s188 = ssub.s32 %s12, 1
        %s189 = sand.u32 %s89, 1
        %s190 = scalar_lea.sflag [#allocation7], %s189
        %s191 = sand.u32 %s89, 1
        %s192 = smul.addr %s191, 128
        %s193 = scalar_lea.vmem [#allocation6], %s192
        // Predicated region
        $region33: #{tpu_custom_call.1} parent=31 // pred_check
          %p194 = pneg %p102
        $region34: #{tpu_custom_call.1} parent=31 // pred_check_branch
          %196 = sbr.rel (%p194) target = $region36
        $region35: #{tpu_custom_call.1} parent=31 // pred_region
          %197 = dma.done %s190, 2048
        $region36: #{tpu_custom_call.1} parent=31 // pred_fallthru
          _
        %p198 = scmp.lt.s32.totalorder %s21, 0
        %s199 = scalar_select %p198, %s21, 0
        %s200 = smul.addr %s199, 8
        %s201 = scalar_lea.vmem %s0, %s200
        %p202 = pneg %p50
        %p203 = pneg %p47
        %p204 = scmp.lt.s32.totalorder %s21, 0
        %s205 = scalar_select %p204, %s21, 0
        %s206 = smul.addr %s205, 8
        %s207 = scalar_lea.vmem %s1, %s206
        %p208 = pneg %p76
        %p209 = pneg %p73
        %s210 = sand.u32 %s89, 1
        %s211 = scalar_lea.sflag [#allocation7], %s210
        %s212 = sand.u32 %s89, 1
        %s213 = smul.addr %s212, 128
        %s214 = scalar_lea.vmem [#allocation6], %s213
        %p215 = pneg %p102
        %p216 = pneg %p99
        %p217 = pneg %p128
        %p218 = pneg %p125
        %p219 = scmp.lt.s32.totalorder %s21, 0
        %s220 = scalar_select %p219, %s21, 0
        %s221 = smul.addr %s220, 8
        %s222 = scalar_lea.vmem %s3, %s221
        %p223 = scmp.lt.s32.totalorder %s21, 0
        %s224 = scalar_select %p223, %s21, 0
        %s225 = smul.addr %s224, 8
        %s226 = scalar_lea.vmem %s0, %s225
        %p227 = scmp.lt.s32.totalorder %s21, 0
        %s228 = scalar_select %p227, %s21, 0
        %s229 = smul.addr %s228, 8
        %s230 = scalar_lea.vmem %s1, %s229
        %s231 = smul.u32 4, %s22
        %p232 = scmp.lt.s32.totalorder %s21, 0
        %s233 = scalar_select %p232, %s21, 0
        %s234 = smul.addr %s233, 8
        %s235 = scalar_lea.vmem %s3, %s234
        %p236 = scmp.eq.s32.totalorder %s22, 0
        // Predicated region
        $region37: #{tpu_custom_call.1} parent=31 // pred_check
          %p237 = pneg %p236
        $region38: #{tpu_custom_call.1} parent=31 // pred_check_branch
          %239 = sbr.rel (%p237) target = $region40
        $region39: #{tpu_custom_call.1} parent=31 // pred_region
          %v240 = vld [vmem:[%s230] sm:$0xff]
          %v241 = vmul.f32 %v240, %v240
          %vm242 = vcmask 261120
          %v243 = vsel %vm242, %v241, 0.0
          %244 = vadd.xlane.f32.xlu0 %v243
          %v245 = vpop.xlane.xlu0 %244
          %v246 = vrsqrt.pop %v245
          %v247 = vmul.f32 %v245, %v246
          %vm248 = vcmp.eq.f32.partialorder %v245, inf
          %v249 = vsel %vm248, %v245, %v247
          %vm250 = vcmp.eq.f32.partialorder %v245, 0.0
          %v251 = vand.u32 %v245, 2147483648
          %v252 = vsel %vm250, %v251, %v249
          %v253 = vmax.f32 %v252, 1e-12
          %v254 = vrcp.pop %v253
          %v255 = vmul.f32 1.0, %v254
          %vm256 = vcmask 7168
          %257 = vst.msk [vmem:[#allocation5] sm:$0xff] %vm256, %v255
          %258 = vst.msk [vmem:[#allocation2] sm:$0xff] %vm256, -1e+30
          %259 = vst.msk [vmem:[#allocation3] sm:$0xff] %vm256, 0.0
          %260 = vst.msk [vmem:[#allocation4] sm:$0xff] %vm256, 0.0
        $region40: #{tpu_custom_call.1} parent=31 // pred_fallthru
          _
        %v261 = vld [vmem:[%s230] sm:$0xff]
        %v262 = vld [vmem:[%s193] sm:$0xff]
        %v263 = vld [vmem:[%s193 + $0x8] sm:$0xff]
        %v264 = vld [vmem:[%s193 + $0x10] sm:$0xff]
        %v265 = vld [vmem:[%s193 + $0x18] sm:$0xff]
        %v266 = vld [vmem:[%s193 + $0x20] sm:$0xff]
        %v267 = vld [vmem:[%s193 + $0x28] sm:$0xff]
        %v268 = vld [vmem:[%s193 + $0x30] sm:$0xff]
        %v269 = vld [vmem:[%s193 + $0x38] sm:$0xff]
        %v270 = vld [vmem:[%s193 + $0x40] sm:$0xff]
        %v271 = vld [vmem:[%s193 + $0x48] sm:$0xff]
        %v272 = vld [vmem:[%s193 + $0x50] sm:$0xff]
        %v273 = vld [vmem:[%s193 + $0x58] sm:$0xff]
        %v274 = vld [vmem:[%s193 + $0x60] sm:$0xff]
        %v275 = vld [vmem:[%s193 + $0x68] sm:$0xff]
        %v276 = vld [vmem:[%s193 + $0x70] sm:$0xff]
        %v277 = vld [vmem:[%s193 + $0x78] sm:$0xff]
        %v278 = vmul.f32 %v262, %v262
        %v279 = vmul.f32 %v263, %v263
        %v280 = vmul.f32 %v264, %v264
        %v281 = vmul.f32 %v265, %v265
        %v282 = vmul.f32 %v266, %v266
        %v283 = vmul.f32 %v267, %v267
        %v284 = vmul.f32 %v268, %v268
        %v285 = vmul.f32 %v269, %v269
        %v286 = vmul.f32 %v270, %v270
        %v287 = vmul.f32 %v271, %v271
        %v288 = vmul.f32 %v272, %v272
        %v289 = vmul.f32 %v273, %v273
        %v290 = vmul.f32 %v274, %v274
        %v291 = vmul.f32 %v275, %v275
        %v292 = vmul.f32 %v276, %v276
        %v293 = vmul.f32 %v277, %v277
        %v294 = vadd.f32 %v278, %v282
        %v295 = vadd.f32 %v294, %v286
        %v296 = vadd.f32 %v295, %v290
        %v297 = vrot.slane %v296, 4
        %v298 = vadd.f32 %v296, %v297
        %v299 = vrot.slane %v298, 2
        %v300 = vadd.f32 %v298, %v299
        %v301 = vrot.slane %v300, 1
        %v302 = vadd.f32 %v300, %v301
        %v303 = vadd.f32 %v279, %v283
        %v304 = vadd.f32 %v303, %v287
        %v305 = vadd.f32 %v304, %v291
        %v306 = vrot.slane %v305, 4
        %v307 = vadd.f32 %v305, %v306
        %v308 = vrot.slane %v307, 2
        %v309 = vadd.f32 %v307, %v308
        %v310 = vrot.slane %v309, 1
        %v311 = vadd.f32 %v309, %v310
        %v312 = vadd.f32 %v280, %v284
        %v313 = vadd.f32 %v312, %v288
        %v314 = vadd.f32 %v313, %v292
        %v315 = vrot.slane %v314, 4
        %v316 = vadd.f32 %v314, %v315
        %v317 = vrot.slane %v316, 2
        %v318 = vadd.f32 %v316, %v317
        %v319 = vrot.slane %v318, 1
        %v320 = vadd.f32 %v318, %v319
        %v321 = vadd.f32 %v281, %v285
        %v322 = vadd.f32 %v321, %v289
        %v323 = vadd.f32 %v322, %v293
        %v324 = vrot.slane %v323, 4
        %v325 = vadd.f32 %v323, %v324
        %v326 = vrot.slane %v325, 2
        %v327 = vadd.f32 %v325, %v326
        %v328 = vrot.slane %v327, 1
        %v329 = vadd.f32 %v327, %v328
        %v330 = vrsqrt.pop %v302
        %v331 = vmul.f32 %v302, %v330
        %vm332 = vcmp.eq.f32.partialorder %v302, inf
        %v333 = vsel %vm332, %v302, %v331
        %vm334 = vcmp.eq.f32.partialorder %v302, 0.0
        %v335 = vand.u32 %v302, 2147483648
        %v336 = vsel %vm334, %v335, %v333
        %v337 = vrsqrt.pop %v311
        %v338 = vmul.f32 %v311, %v337
        %vm339 = vcmp.eq.f32.partialorder %v311, inf
        %v340 = vsel %vm339, %v311, %v338
        %vm341 = vcmp.eq.f32.partialorder %v311, 0.0
        %v342 = vand.u32 %v311, 2147483648
        %v343 = vsel %vm341, %v342, %v340
        %v344 = vrsqrt.pop %v320
        %v345 = vmul.f32 %v320, %v344
        %vm346 = vcmp.eq.f32.partialorder %v320, inf
        %v347 = vsel %vm346, %v320, %v345
        %vm348 = vcmp.eq.f32.partialorder %v320, 0.0
        %v349 = vand.u32 %v320, 2147483648
        %v350 = vsel %vm348, %v349, %v347
        %v351 = vrsqrt.pop %v329
        %v352 = vmul.f32 %v329, %v351
        %vm353 = vcmp.eq.f32.partialorder %v329, inf
        %v354 = vsel %vm353, %v329, %v352
        %vm355 = vcmp.eq.f32.partialorder %v329, 0.0
        %v356 = vand.u32 %v329, 2147483648
        %v357 = vsel %vm355, %v356, %v354
        %v358 = vmax.f32 %v336, 1e-12
        %v359 = vmax.f32 %v343, 1e-12
        %v360 = vmax.f32 %v350, 1e-12
        %v361 = vmax.f32 %v357, 1e-12
        %v362 = vrcp.pop %v358
        %v363 = vmul.f32 1.0, %v362
        %v364 = vrcp.pop %v359
        %v365 = vmul.f32 1.0, %v364
        %v366 = vrcp.pop %v360
        %v367 = vmul.f32 1.0, %v366
        %v368 = vrcp.pop %v361
        %v369 = vmul.f32 1.0, %v368
        %vm370 = vcmask 261120
        %v372 = vsel %vm370, %v261, 0
        %374 = vmatprep.subr.mxu0 0.0
        %375 = vmatpush1.msra.mxu0 0.0
        %376 = vmatprep.subr.mxu0 0.0
        %377 = vmatpush1.msra.mxu0 0.0
        %378 = vmatprep.subr.mxu0 0.0
        %379 = vmatpush1.msra.mxu0 0.0
        %380 = vmatprep.subr.mxu0 0.0
        %381 = vmatpush1.msra.mxu0 0.0
        %382 = vmatprep.subr.mxu0 0.0
        %383 = vmatpush1.msra.mxu0 0.0
        %384 = vmatprep.subr.mxu0 0.0
        %385 = vmatpush1.msra.mxu0 0.0
        %386 = vmatprep.subr.mxu0 0.0
        %387 = vmatpush1.msra.mxu0 0.0
        %388 = vmatprep.subr.mxu0 0.0
        %389 = vmatpush1.msra.mxu0 0.0
        %390 = vmatprep.subr.mxu0 0.0
        %391 = vmatpush1.msra.mxu0 0.0
        %392 = vmatprep.subr.mxu0 0.0
        %393 = vmatpush1.msra.mxu0 0.0
        %394 = vmatprep.subr.mxu0 0.0
        %395 = vmatpush1.msra.mxu0 0.0
        %396 = vmatprep.subr.mxu0 0.0
        %397 = vmatpush1.msra.mxu0 0.0
        %398 = vmatprep.subr.mxu0 %v275
        %399 = vmatpush1.msra.mxu0 %v274
        %400 = vmatprep.subr.mxu0 %v271
        %401 = vmatpush1.msra.mxu0 %v270
        %402 = vmatprep.subr.mxu0 %v267
        %403 = vmatpush1.msra.mxu0 %v266
        %404 = vmatprep.subr.mxu0 %v263
        %405 = vmatpush1.msra.mxu0 %v262
        %406 = vmatprep.subr.mxu0 0.0
        %407 = vmatpush2.msra.mxu0 0.0
        %408 = vmatprep.subr.mxu0 0.0
        %409 = vmatpush2.msra.mxu0 0.0
        %410 = vmatprep.subr.mxu0 0.0
        %411 = vmatpush2.msra.mxu0 0.0
        %412 = vmatprep.subr.mxu0 0.0
        %413 = vmatpush2.msra.mxu0 0.0
        %414 = vmatprep.subr.mxu0 0.0
        %415 = vmatpush2.msra.mxu0 0.0
        %416 = vmatprep.subr.mxu0 0.0
        %417 = vmatpush2.msra.mxu0 0.0
        %418 = vmatprep.subr.mxu0 0.0
        %419 = vmatpush2.msra.mxu0 0.0
        %420 = vmatprep.subr.mxu0 0.0
        %421 = vmatpush2.msra.mxu0 0.0
        %422 = vmatprep.subr.mxu0 0.0
        %423 = vmatpush2.msra.mxu0 0.0
        %424 = vmatprep.subr.mxu0 0.0
        %425 = vmatpush2.msra.mxu0 0.0
        %426 = vmatprep.subr.mxu0 0.0
        %427 = vmatpush2.msra.mxu0 0.0
        %428 = vmatprep.subr.mxu0 0.0
        %429 = vmatpush2.msra.mxu0 0.0
        %430 = vmatprep.subr.mxu0 0.0
        %431 = vmatpush2.msra.mxu0 0.0
        %432 = vmatprep.subr.mxu0 0.0
        %433 = vmatpush2.msra.mxu0 0.0
        %434 = vmatprep.subr.mxu0 0.0
        %435 = vmatpush2.msra.mxu0 0.0
        %436 = vmatprep.subr.mxu0 0.0
        %437 = vmatpush2.msra.mxu0 0.0
        %438 = vmatprep.mubr.f32.mxu0 0.0
        %439 = vmatmul.mubr.f32.gmra.mxu0 %v372
        %v440 = vpop.f32.mrf.mxu0
        %v441 = vadd.f32 0.0, %v440
        %v442 = vpop.f32.mrf.mxu0
        %v443 = vadd.f32 0.0, %v442
        %444 = vdwg.mxu0
        %445 = vmatprep.subr.mxu0 0.0
        %446 = vmatpush1.msra.mxu0 0.0
        %447 = vmatprep.subr.mxu0 0.0
        %448 = vmatpush1.msra.mxu0 0.0
        %449 = vmatprep.subr.mxu0 0.0
        %450 = vmatpush1.msra.mxu0 0.0
        %451 = vmatprep.subr.mxu0 0.0
        %452 = vmatpush1.msra.mxu0 0.0
        %453 = vmatprep.subr.mxu0 0.0
        %454 = vmatpush1.msra.mxu0 0.0
        %455 = vmatprep.subr.mxu0 0.0
        %456 = vmatpush1.msra.mxu0 0.0
        %457 = vmatprep.subr.mxu0 0.0
        %458 = vmatpush1.msra.mxu0 0.0
        %459 = vmatprep.subr.mxu0 0.0
        %460 = vmatpush1.msra.mxu0 0.0
        %461 = vmatprep.subr.mxu0 0.0
        %462 = vmatpush1.msra.mxu0 0.0
        %463 = vmatprep.subr.mxu0 0.0
        %464 = vmatpush1.msra.mxu0 0.0
        %465 = vmatprep.subr.mxu0 0.0
        %466 = vmatpush1.msra.mxu0 0.0
        %467 = vmatprep.subr.mxu0 0.0
        %468 = vmatpush1.msra.mxu0 0.0
        %469 = vmatprep.subr.mxu0 %v277
        %470 = vmatpush1.msra.mxu0 %v276
        %471 = vmatprep.subr.mxu0 %v273
        %472 = vmatpush1.msra.mxu0 %v272
        %473 = vmatprep.subr.mxu0 %v269
        %474 = vmatpush1.msra.mxu0 %v268
        %475 = vmatprep.subr.mxu0 %v265
        %476 = vmatpush1.msra.mxu0 %v264
        %477 = vmatprep.subr.mxu0 0.0
        %478 = vmatpush2.msra.mxu0 0.0
        %479 = vmatprep.subr.mxu0 0.0
        %480 = vmatpush2.msra.mxu0 0.0
        %481 = vmatprep.subr.mxu0 0.0
        %482 = vmatpush2.msra.mxu0 0.0
        %483 = vmatprep.subr.mxu0 0.0
        %484 = vmatpush2.msra.mxu0 0.0
        %485 = vmatprep.subr.mxu0 0.0
        %486 = vmatpush2.msra.mxu0 0.0
        %487 = vmatprep.subr.mxu0 0.0
        %488 = vmatpush2.msra.mxu0 0.0
        %489 = vmatprep.subr.mxu0 0.0
        %490 = vmatpush2.msra.mxu0 0.0
        %491 = vmatprep.subr.mxu0 0.0
        %492 = vmatpush2.msra.mxu0 0.0
        %493 = vmatprep.subr.mxu0 0.0
        %494 = vmatpush2.msra.mxu0 0.0
        %495 = vmatprep.subr.mxu0 0.0
        %496 = vmatpush2.msra.mxu0 0.0
        %497 = vmatprep.subr.mxu0 0.0
        %498 = vmatpush2.msra.mxu0 0.0
        %499 = vmatprep.subr.mxu0 0.0
        %500 = vmatpush2.msra.mxu0 0.0
        %501 = vmatprep.subr.mxu0 0.0
        %502 = vmatpush2.msra.mxu0 0.0
        %503 = vmatprep.subr.mxu0 0.0
        %504 = vmatpush2.msra.mxu0 0.0
        %505 = vmatprep.subr.mxu0 0.0
        %506 = vmatpush2.msra.mxu0 0.0
        %507 = vmatprep.subr.mxu0 0.0
        %508 = vmatpush2.msra.mxu0 0.0
        %509 = vmatprep.mubr.f32.mxu0 0.0
        %510 = vmatmul.mubr.f32.gmra.mxu0 %v372
        %v511 = vpop.f32.mrf.mxu0
        %v512 = vadd.f32 0.0, %v511
        %v513 = vpop.f32.mrf.mxu0
        %v514 = vadd.f32 0.0, %v513
        %515 = vdwg.mxu0
        %v516 = vld [vmem:[#allocation5] sm:$0xff]
        %518 = vset.pattern.permute.xlu0 0
        %519 = vperm.xlu0 %518, %v516
        %v520 = vpop.permute.xlu0 %519
        %v522 = vmul.f32 %v441, %v520
        %v523 = vmul.f32 %v443, %v520
        %v524 = vmul.f32 %v512, %v520
        %v525 = vmul.f32 %v514, %v520
        %v526 = vmul.f32 %v522, %v363
        %v527 = vmul.f32 %v523, %v365
        %v528 = vmul.f32 %v524, %v367
        %v529 = vmul.f32 %v525, %v369
        %s530 = smul.u32 %s22, 512
        %v531 = vlaneseq
        %v532 = vand.u32 %v531, 127
        %v533 = vadd.s32 %v532, 128
        %v534 = vadd.s32 %v532, 256
        %v535 = vadd.s32 %v532, 384
        %v536 = vstv %s530
        %v537 = vadd.s32 %v536, %v532
        %v538 = vadd.s32 %v536, %v533
        %v539 = vadd.s32 %v536, %v534
        %v540 = vadd.s32 %v536, %v535
        %v541 = vld [vmem:[%s226] sm:$0xff]
        %542 = vset.pattern.permute.xlu0 0
        %543 = vperm.xlu0 %542, %v541
        %v544 = vpop.permute.xlu0 %543
        %vm545 = vcmp.eq.s32.totalorder %v537, %v544
        %vm546 = vcmp.eq.s32.totalorder %v538, %v544
        %vm547 = vcmp.eq.s32.totalorder %v539, %v544
        %vm548 = vcmp.eq.s32.totalorder %v540, %v544
        %v549 = vsel %vm545, 0.3, 0.0
        %v550 = vsel %vm546, 0.3, 0.0
        %v551 = vsel %vm547, 0.3, 0.0
        %v552 = vsel %vm548, 0.3, 0.0
        %v553 = vsub.f32 %v526, %v549
        %v554 = vsub.f32 %v527, %v550
        %v555 = vsub.f32 %v528, %v551
        %v556 = vsub.f32 %v529, %v552
        %v557 = vmul.f32 %v553, 15.0
        %v558 = vmul.f32 %v554, 15.0
        %v559 = vmul.f32 %v555, 15.0
        %v560 = vmul.f32 %v556, 15.0
        %vm561 = vcmp.lt.s32.totalorder %v537, 751
        %vm562 = vcmp.lt.s32.totalorder %v538, 751
        %vm563 = vcmp.lt.s32.totalorder %v539, 751
        %vm564 = vcmp.lt.s32.totalorder %v540, 751
        %v565 = vsel %vm561, %v557, -1e+30
        %v566 = vsel %vm562, %v558, -1e+30
        %v567 = vsel %vm563, %v559, -1e+30
        %v568 = vsel %vm564, %v560, -1e+30
        %v569 = vmax.f32 %v565, %v566
        %v570 = vmax.f32 %v567, %v568
        %v571 = vmax.f32 %v569, %v570
        %572 = vmax.xlane.f32.xlu0 %v571
        %v573 = vpop.xlane.xlu0 %572
        %v574 = vld [vmem:[#allocation2] sm:$0xff]
        %v575 = vmax.f32 %v574, %v573
        %v576 = vsub.f32 %v574, %v575
        %v577 = vmul.f32 %v576, 1.442695
        %v578 = vpow.pop %v577
        %v579 = vld [vmem:[#allocation3] sm:$0xff]
        %v580 = vmul.f32 %v578, %v579
        %582 = vset.pattern.permute.xlu0 0
        %583 = vperm.xlu0 %582, %v575
        %v584 = vpop.permute.xlu0 %583
        %v586 = vsub.f32 %v565, %v584
        %v587 = vsub.f32 %v566, %v584
        %v588 = vsub.f32 %v567, %v584
        %v589 = vsub.f32 %v568, %v584
        %v590 = vmul.f32 %v586, 1.442695
        %v591 = vpow.pop %v590
        %v592 = vmul.f32 %v587, 1.442695
        %v593 = vpow.pop %v592
        %v594 = vmul.f32 %v588, 1.442695
        %v595 = vpow.pop %v594
        %v596 = vmul.f32 %v589, 1.442695
        %v597 = vpow.pop %v596
        %v598 = vadd.f32 %v591, %v593
        %v599 = vadd.f32 %v598, %v595
        %v600 = vadd.f32 %v599, %v597
        %601 = vadd.xlane.f32.xlu0 %v600
        %v602 = vpop.xlane.xlu0 %601
        %v603 = vadd.f32 %v580, %v602
        %vm604 = vcmask 7168
        %605 = vst.msk [vmem:[#allocation3] sm:$0xff] %vm604, %v603
        %606 = vst.msk [vmem:[#allocation2] sm:$0xff] %vm604, %v575
        %v607 = vld [vmem:[#allocation4] sm:$0xff]
        %v608 = vsel %vm545, %v565, 0.0
        %v609 = vsel %vm546, %v566, 0.0
        %v610 = vsel %vm547, %v567, 0.0
        %v611 = vsel %vm548, %v568, 0.0
        %v612 = vadd.f32 %v608, %v609
        %v613 = vadd.f32 %v612, %v610
        %v614 = vadd.f32 %v613, %v611
        %615 = vadd.xlane.f32.xlu0 %v614
        %v616 = vpop.xlane.xlu0 %615
        %v617 = vadd.f32 %v607, %v616
        %618 = vst.msk [vmem:[#allocation4] sm:$0xff] %vm604, %v617
        %p619 = scmp.eq.s32.totalorder %s22, 1
        // Predicated region
        $region41: #{tpu_custom_call.1} parent=31 // pred_check
          %p620 = pneg %p619
        $region42: #{tpu_custom_call.1} parent=31 // pred_check_branch
          %622 = sbr.rel (%p620) target = $region44
        $region43: #{tpu_custom_call.1} parent=31 // pred_region
          %v623 = vld [vmem:[#allocation2] sm:$0xff]
          %v624 = vld [vmem:[#allocation3] sm:$0xff]
          %v625 = vlog2.pop %v624
          %v626 = vmul.f32 %v625, 0.6931472
          %v627 = vadd.f32 %v623, %v626
          %v628 = vld [vmem:[#allocation4] sm:$0xff]
          %v629 = vsub.f32 %v627, %v628
          %630 = vst.msk [vmem:[%s235] sm:$0xff] %vm604, %v629
        $region44: #{tpu_custom_call.1} parent=31 // pred_fallthru
          _
        %p631 = scmp.lt.s32.totalorder %s21, 0
        %s632 = scalar_select %p631, %s21, 0
        %s633 = smul.addr %s632, 8
        %s634 = scalar_lea.vmem %s3, %s633
        // Predicated region
        $region45: #{tpu_custom_call.1} parent=31 // pred_check
          %p635 = pneg %p125
        $region46: #{tpu_custom_call.1} parent=31 // pred_check_branch
          %637 = sbr.rel (%p635) target = $region48
        $region47: #{tpu_custom_call.1} parent=31 // pred_region
          _
        $region48: #{tpu_custom_call.1} parent=31 // pred_fallthru
          _
        // Predicated region
        $region49: #{tpu_custom_call.1} parent=31 // pred_check
          %p638 = pneg %p125
        $region50: #{tpu_custom_call.1} parent=31 // pred_check_branch
          %640 = sbr.rel (%p638) target = $region52
        $region51: #{tpu_custom_call.1} parent=31 // pred_region
          %p641 = scmp.lt.s32.totalorder %s21, 0
          %s642 = scalar_select %p641, %s21, 0
          %s643 = smul.addr %s642, 8
          %s644 = scalar_lea.vmem %s3, %s643
        $region52: #{tpu_custom_call.1} parent=31 // pred_fallthru
          _
      $region32: #{tpu_custom_call.1} parent=5 // pred_fallthru
        _
      %p645 = scmp.le.s32.totalorder 2, %s12
      // Predicated region
      $region53: #{tpu_custom_call.1} parent=5 // pred_check
        %p646 = pneg %p645
      $region54: #{tpu_custom_call.1} parent=5 // pred_check_branch
        %648 = sbr.rel (%p646) target = $region56
      $region55: #{tpu_custom_call.1} parent=5 // pred_region
        %s649 = ssub.s32 %s12, 2
      $region56: #{tpu_custom_call.1} parent=5 // pred_fallthru
        _
    $region6: #{tpu_custom_call.1} parent=1 // loop_footer
      %s16 = sadd.s32 1, %s12
    $region7: #{tpu_custom_call.1} parent=1 // loop_footer_branch
      %11 = sbr.rel target = $region3
    $region8: #{tpu_custom_call.1} parent=1 // loop_exit
      _
    %650 = vsyncpa [#allocation7], 1
    %s651 = scalar_lea.sflag [#allocation7], 1
    %652 = vsyncpa %s651, 1

</llo_original>
